<compile_context>
chip_gen: v5e
topology: v5e:2x2
jax: 0.10.0
libtpu: 0.0.40
codegen_flags: <defaults>
</compile_context>

<pallas_src>
import functools

import jax
import jax.numpy as jnp
from jax.experimental import pallas as pl
from jax.experimental.pallas import tpu as pltpu


def _round_up(x, m):
    return ((x + m - 1) // m) * m


# ----------------------------------------------------------------------------
# Kernel: one grid step == one chunk of timesteps for one batch tile.
# The [x | h] slab lives in VMEM scratch and persists across time chunks
# (grid time axis is "arbitrary" => sequential), so the hidden state never
# leaves the chip during the sequence.
# ----------------------------------------------------------------------------
def rnn_chunk_kernel(h0_ref, x_ref, w1_ref, b1_ref, w2_ref, b2_ref,
                     logp_ref, hfin_ref, xh_ref,
                     *, input_size, hidden_size, t_chunk):
    I, H = input_size, hidden_size
    c = pl.program_id(1)            # time-chunk index (sequential / "arbitrary")

    # (Re-)seed the hidden columns of the slab at the start of each sequence
    # (i.e. at the first time chunk of every batch tile).
    @pl.when(c == 0)
    def _():
        xh_ref[:, I:] = h0_ref[...]

    b_tile = xh_ref.shape[0]
    NP = w1_ref.shape[1]            # padded H+O (lane-aligned, 128)
    OP = w2_ref.shape[1]            # padded O    (lane-aligned, 128)

    # Hoist loop-invariant reads + bias broadcasts out of the timestep loop
    # (JAX does not CSE broadcast_in_dim; repeated ref reads burn vld slots).
    w1 = w1_ref[...]                                    # (I+H, NP)
    w2 = w2_ref[...]                                    # (NP, OP)
    b1 = jnp.broadcast_to(b1_ref[...], (b_tile, NP))
    b2 = jnp.broadcast_to(b2_ref[...], (b_tile, OP))    # padded entries = -1e30

    def step(i, carry):
        # Slab columns [0:I] <- current input; [I:I+H] already hold h_{t-1}.
        xh_ref[:, :I] = x_ref[i]                        # (b_tile, I)

        # Stage 1 (fused i2h & i2o, single MXU op):
        #   s1 = [x|h] @ [Wi2h^T | Wi2o^T | 0] + [bi2h | bi2o | 0]
        s1 = jnp.dot(xh_ref[...], w1,
                     preferred_element_type=jnp.float32) + b1   # (b_tile, NP)

        # Stage 2 (o2o on the already-concatenated slab).
        out2 = jnp.dot(s1, w2,
                       preferred_element_type=jnp.float32) + b2  # (b_tile, OP)

        # dropout(p=0.1): identity in eval mode.

        # log_softmax over features; padded logits sit at -1e30 so they do not
        # perturb max or the exp-sum.
        m = jnp.max(out2, axis=1, keepdims=True)
        z = out2 - m
        lse = jnp.log(jnp.sum(jnp.exp(z), axis=1, keepdims=True))
        logp_ref[i] = z - lse                            # lane-dense (128) store

        # Carry hidden_new into the slab for the next step.
        xh_ref[:, I:] = s1[:, :H]
        return carry

    jax.lax.fori_loop(0, t_chunk, step, 0, unroll=True)

    # Final-hidden output block has a constant index across the time axis, so
    # it stays VMEM-resident and is flushed to HBM only once per batch tile.
    hfin_ref[...] = xh_ref[:, I:]


# ----------------------------------------------------------------------------
# Wrappers
# ----------------------------------------------------------------------------
def rnn_sequence_forward(xs, h0, kparams, *, t_chunk=None, batch_tile=None):
    """xs: (T, B, I) f32, h0: (B, H) f32.
    Returns (log_probs (T, B, O), final_hidden (B, H))."""
    T, B, I = xs.shape
    H = h0.shape[1]
    NP = kparams["w1"].shape[1]
    OP = kparams["w2"].shape[1]
    O = kparams["out_size"]

    if t_chunk is None:
        t_chunk = T                      # T=8 demo: whole sequence in one grid step
    if batch_tile is None:
        batch_tile = B
    assert T % t_chunk == 0, "T must be divisible by t_chunk"
    assert B % batch_tile == 0, "B must be divisible by batch_tile"
    assert batch_tile % 8 == 0, "batch_tile should be a multiple of 8 (f32 sublanes)"

    n_bt = B // batch_tile
    n_tc = T // t_chunk

    kernel = functools.partial(rnn_chunk_kernel,
                               input_size=I, hidden_size=H, t_chunk=t_chunk)

    logp_pad, h_final = pl.pallas_call(
        kernel,
        out_shape=(jax.ShapeDtypeStruct((T, B, OP), jnp.float32),
                   jax.ShapeDtypeStruct((B, H), jnp.float32)),
        grid=(n_bt, n_tc),
        in_specs=[
            pl.BlockSpec((batch_tile, H), lambda b, c: (b, 0)),              # h0
            pl.BlockSpec((t_chunk, batch_tile, I), lambda b, c: (c, b, 0)),  # xs chunk
            pl.BlockSpec((I + H, NP), lambda b, c: (0, 0)),                  # W1 (resident)
            pl.BlockSpec((1, NP), lambda b, c: (0, 0)),                      # b1 (resident)
            pl.BlockSpec((NP, OP), lambda b, c: (0, 0)),                     # W2 (resident)
            pl.BlockSpec((1, OP), lambda b, c: (0, 0)),                      # b2 (resident)
        ],
        out_specs=(
            pl.BlockSpec((t_chunk, batch_tile, OP), lambda b, c: (c, b, 0)),  # log-probs
            pl.BlockSpec((batch_tile, H), lambda b, c: (b, 0)),               # final hidden
        ),
        scratch_shapes=[pltpu.VMEM((batch_tile, I + H), jnp.float32)],        # [x|h] slab
        compiler_params=pltpu.CompilerParams(
            # Batch tiles are independent (megacore-shardable on v7x); the time
            # axis carries the recurrence and MUST remain "arbitrary".
            dimension_semantics=("parallel", "arbitrary"),
            vmem_limit_bytes=32 * 1024 * 1024,
        ),
    )(h0, xs, kparams["w1"], kparams["b1"], kparams["w2"], kparams["b2"])

    return logp_pad[..., :O], h_final


def rnn_step(x, h, kparams):
    """Single-step API matching the PyTorch module: returns (log_probs, hidden_new)."""
    logp, h_new = rnn_sequence_forward(x[None], h, kparams, t_chunk=1)
    return logp[0], h_new


# ----------------------------------------------------------------------------
# Parameter construction (PyTorch layout) and one-time kernel-layout prep.
# ----------------------------------------------------------------------------
def init_params(key, input_size, hidden_size, output_size):
    """Deterministic init matching nn.Linear shapes (uniform(-1/sqrt(fan_in), +))."""
    ks = jax.random.split(key, 6)

    def linear(kw, kb, out_f, in_f):
        bound = 1.0 / jnp.sqrt(jnp.float32(in_f))
        w = jax.random.uniform(kw, (out_f, in_f), jnp.float32, -bound, bound)
        b = jax.random.uniform(kb, (out_f,), jnp.float32, -bound, bound)
        return w, b

    i2h_w, i2h_b = linear(ks[0], ks[1], hidden_size, input_size + hidden_size)
    i2o_w, i2o_b = linear(ks[2], ks[3], output_size, input_size + hidden_size)
    o2o_w, o2o_b = linear(ks[4], ks[5], output_size, hidden_size + output_size)
    return dict(i2h_w=i2h_w, i2h_b=i2h_b,
                i2o_w=i2o_w, i2o_b=i2o_b,
                o2o_w=o2o_w, o2o_b=o2o_b)


def prep_params(params, input_size, hidden_size, output_size, lane=128):
    """One-time layout prep:
      * fuse i2h/i2o into a single (I+H, H+O) weight, transposed to
        (in_features, out_features),
      * zero-pad the fused N dim (H+O) and the logit dim (O) up to 128 lanes,
      * padded b2 entries are -1e30 so the padded logits vanish in log_softmax."""
    I, H, O = input_size, hidden_size, output_size
    NP = _round_up(H + O, lane)
    OP = _round_up(O, lane)

    wih, wio, woo = params["i2h_w"], params["i2o_w"], params["o2o_w"]

    w1 = jnp.zeros((I + H, NP), jnp.float32)
    w1 = w1.at[:, :H].set(wih.T)                 # i2h
    w1 = w1.at[:, H:H + O].set(wio.T)            # i2o
    b1 = jnp.zeros((1, NP), jnp.float32)
    b1 = b1.at[0, :H].set(params["i2h_b"])
    b1 = b1.at[0, H:H + O].set(params["i2o_b"])

    w2 = jnp.zeros((NP, OP), jnp.float32)
    w2 = w2.at[:H + O, :O].set(woo.T)            # o2o (padded rows/cols are zero)
    b2 = jnp.full((1, OP), -1e30, jnp.float32)   # padded logits -> -1e30
    b2 = b2.at[0, :O].set(params["o2o_b"])

    return dict(w1=w1, b1=b1, w2=w2, b2=b2, out_size=O)


# ----------------------------------------------------------------------------
# Pure-JAX reference (mirrors the PyTorch forward, eval mode).
# ----------------------------------------------------------------------------
def reference_step(x, h, params):
    ic = jnp.concatenate([x, h], axis=1)
    hidden_new = ic @ params["i2h_w"].T + params["i2h_b"]
    output = ic @ params["i2o_w"].T + params["i2o_b"]
    oc = jnp.concatenate([hidden_new, output], axis=1)
    out = oc @ params["o2o_w"].T + params["o2o_b"]
    return jax.nn.log_softmax(out, axis=1), hidden_new


def reference_sequence(xs, h0, params):
    def body(h, x):
        lp, hn = reference_step(x, h, params)
        return hn, lp
    h_final, lps = jax.lax.scan(body, h0, xs)
    return lps, h_final


if __name__ == "__main__":
    # Small shapes consistent with the module API; B=8 keeps f32 sublanes full.
    T, B, INPUT, HIDDEN, OUTPUT = 8, 8, 16, 32, 16

    key = jax.random.PRNGKey(0)
    k_x, k_h, k_p = jax.random.split(key, 3)
    xs = jax.random.normal(k_x, (T, B, INPUT), jnp.float32)
    h0 = jax.random.normal(k_h, (B, HIDDEN), jnp.float32)

    params = init_params(k_p, INPUT, HIDDEN, OUTPUT)
    kparams = prep_params(params, INPUT, HIDDEN, OUTPUT)   # one-time layout prep

    # Fused-sequence kernel: whole T=8 sequence in a single grid step.
    logp, h_final = rnn_sequence_forward(xs, h0, kparams)
    jax.block_until_ready((logp, h_final))

    ref_logp, ref_h = reference_sequence(xs, h0, params)
    assert jnp.allclose(logp, ref_logp, atol=1e-4, rtol=1e-4), "sequence log_softmax mismatch"
    assert jnp.allclose(h_final, ref_h, atol=1e-4, rtol=1e-4), "final hidden mismatch"

    # Single-step API (module-equivalent signature) sanity check.
    lp1, h1 = rnn_step(xs[0], h0, kparams)
    ref_lp1, ref_h1 = reference_step(xs[0], h0, params)
    assert jnp.allclose(lp1, ref_lp1, atol=1e-4, rtol=1e-4), "single-step output mismatch"
    assert jnp.allclose(h1, ref_h1, atol=1e-4, rtol=1e-4), "single-step hidden mismatch"

    print("KERNEL_OK")
</pallas_src>

<mosaic_0001>
module attributes {stable_mosaic.version = 11 : i64} {
  func.func @rnn_chunk_kernel(%arg0: i32, %arg1: i32, %arg2: memref<8x32xf32, #tpu.memory_space<vmem>>, %arg3: memref<8x8x16xf32, #tpu.memory_space<vmem>>, %arg4: memref<48x128xf32, #tpu.memory_space<vmem>>, %arg5: memref<1x128xf32, #tpu.memory_space<vmem>>, %arg6: memref<128x128xf32, #tpu.memory_space<vmem>>, %arg7: memref<1x128xf32, #tpu.memory_space<vmem>>, %arg8: memref<8x8x128xf32, #tpu.memory_space<vmem>>, %arg9: memref<8x32xf32, #tpu.memory_space<vmem>>, %arg10: memref<8x48xf32, #tpu.memory_space<vmem>>) attributes {dimension_semantics = [#tpu.dimension_semantics<parallel>, #tpu.dimension_semantics<arbitrary>], iteration_bounds = array<i64: 1, 1>, scalar_prefetch = 0 : i64, scratch_operands = 1 : i64, tpu.core_type = #tpu.core_type<tc>, window_params = [{transform_indices = @transform_0, window_bounds = array<i64: 8, 32>}, {transform_indices = @transform_1, window_bounds = array<i64: 8, 8, 16>}, {pipeline_mode = #tpu.pipeline_mode<synchronous>, transform_indices = @transform_2, window_bounds = array<i64: 48, 128>}, {pipeline_mode = #tpu.pipeline_mode<synchronous>, transform_indices = @transform_3, window_bounds = array<i64: 1, 128>}, {pipeline_mode = #tpu.pipeline_mode<synchronous>, transform_indices = @transform_4, window_bounds = array<i64: 128, 128>}, {pipeline_mode = #tpu.pipeline_mode<synchronous>, transform_indices = @transform_5, window_bounds = array<i64: 1, 128>}, {transform_indices = @transform_6, window_bounds = array<i64: 8, 8, 128>}, {transform_indices = @transform_7, window_bounds = array<i64: 8, 32>}]} {
    %c0_i32 = arith.constant 0 : i32
    %0 = arith.cmpi eq, %arg1, %c0_i32 : i32
    %1 = arith.extui %0 : i1 to i32
    %c0_i32_0 = arith.constant 0 : i32
    %2 = arith.cmpi ne, %1, %c0_i32_0 : i32
    scf.if %2 {
      %c0_123 = arith.constant 0 : index
      %c0_124 = arith.constant 0 : index
      %213 = vector.load %arg2[%c0_123, %c0_124] : memref<8x32xf32, #tpu.memory_space<vmem>>, vector<8x32xf32>
      %c0_125 = arith.constant 0 : index
      %c16_126 = arith.constant 16 : index
      %214 = vector.load %arg10[%c0_125, %c16_126] : memref<8x48xf32, #tpu.memory_space<vmem>>, vector<8x32xf32>
      tpu.vector_store %arg10[%c0_125, %c16_126], %213 {strides = array<i32>} : memref<8x48xf32, #tpu.memory_space<vmem>>, vector<8x32xf32>,
    } else {
    }
    %c0 = arith.constant 0 : index
    %c0_1 = arith.constant 0 : index
    %3 = vector.load %arg4[%c0, %c0_1] : memref<48x128xf32, #tpu.memory_space<vmem>>, vector<48x128xf32>
    %c0_2 = arith.constant 0 : index
    %c0_3 = arith.constant 0 : index
    %4 = vector.load %arg6[%c0_2, %c0_3] : memref<128x128xf32, #tpu.memory_space<vmem>>, vector<128x128xf32>
    %c0_4 = arith.constant 0 : index
    %c0_5 = arith.constant 0 : index
    %5 = vector.load %arg5[%c0_4, %c0_5] : memref<1x128xf32, #tpu.memory_space<vmem>>, vector<1x128xf32>
    %6 = vector.shape_cast %5 : vector<1x128xf32> to vector<1x128xf32>
    %7 = vector.broadcast %6 : vector<1x128xf32> to vector<8x128xf32>
    %c0_6 = arith.constant 0 : index
    %c0_7 = arith.constant 0 : index
    %8 = vector.load %arg7[%c0_6, %c0_7] : memref<1x128xf32, #tpu.memory_space<vmem>>, vector<1x128xf32>
    %9 = vector.shape_cast %8 : vector<1x128xf32> to vector<1x128xf32>
    %10 = vector.broadcast %9 : vector<1x128xf32> to vector<8x128xf32>
    %c0_i32_8 = arith.constant 0 : i32
    %11 = arith.index_cast %c0_i32_8 : i32 to index
    %c0_9 = arith.constant 0 : index
    %c0_10 = arith.constant 0 : index
    %12 = vector.load %arg3[%11, %c0_9, %c0_10] : memref<8x8x16xf32, #tpu.memory_space<vmem>>, vector<1x8x16xf32>
    %13 = vector.shape_cast %12 : vector<1x8x16xf32> to vector<8x16xf32>
    %c0_11 = arith.constant 0 : index
    %c0_12 = arith.constant 0 : index
    %14 = vector.load %arg10[%c0_11, %c0_12] : memref<8x48xf32, #tpu.memory_space<vmem>>, vector<8x16xf32>
    tpu.vector_store %arg10[%c0_11, %c0_12], %13 {strides = array<i32>} : memref<8x48xf32, #tpu.memory_space<vmem>>, vector<8x16xf32>,
    %c0_13 = arith.constant 0 : index
    %c0_14 = arith.constant 0 : index
    %15 = vector.load %arg10[%c0_13, %c0_14] : memref<8x48xf32, #tpu.memory_space<vmem>>, vector<8x48xf32>
    %cst = arith.constant dense<0.000000e+00> : vector<8x128xf32>
    %16 = tpu.matmul %15, %3, %cst {dimension_numbers = #tpu.dot_dimension_numbers<[1], [0], [0], [1], [0, 0, 1, 1], [], []>} : vector<8x48xf32>, vector<48x128xf32>, vector<8x128xf32> -> vector<8x128xf32>
    %17 = arith.addf %16, %7 : vector<8x128xf32>
    %cst_15 = arith.constant dense<0.000000e+00> : vector<8x128xf32>
    %18 = tpu.matmul %17, %4, %cst_15 {dimension_numbers = #tpu.dot_dimension_numbers<[1], [0], [0], [1], [0, 0, 1, 1], [], []>} : vector<8x128xf32>, vector<128x128xf32>, vector<8x128xf32> -> vector<8x128xf32>
    %19 = arith.addf %18, %10 : vector<8x128xf32>
    %cst_16 = arith.constant dense<0xFF800000> : vector<8xf32>
    %20 = vector.multi_reduction <maximumf>, %19, %cst_16 [1] : vector<8x128xf32> to vector<8xf32>
    %21 = vector.shape_cast %20 : vector<8xf32> to vector<8x1xf32>
    %22 = vector.broadcast %21 : vector<8x1xf32> to vector<8x128xf32>
    %23 = arith.subf %19, %22 : vector<8x128xf32>
    %24 = math.exp %23 : vector<8x128xf32>
    %cst_17 = arith.constant dense<0.000000e+00> : vector<8xf32>
    %25 = vector.multi_reduction <add>, %24, %cst_17 [1] : vector<8x128xf32> to vector<8xf32>
    %26 = vector.shape_cast %25 : vector<8xf32> to vector<8x1xf32>
    %27 = math.log %26 : vector<8x1xf32>
    %28 = vector.broadcast %27 : vector<8x1xf32> to vector<8x128xf32>
    %29 = arith.subf %23, %28 : vector<8x128xf32>
    %30 = arith.index_cast %c0_i32_8 : i32 to index
    %c0_18 = arith.constant 0 : index
    %c0_19 = arith.constant 0 : index
    %31 = vector.load %arg8[%30, %c0_18, %c0_19] : memref<8x8x128xf32, #tpu.memory_space<vmem>>, vector<1x8x128xf32>
    %32 = vector.shape_cast %31 : vector<1x8x128xf32> to vector<8x128xf32>
    %33 = vector.shape_cast %29 : vector<8x128xf32> to vector<1x8x128xf32>
    tpu.vector_store %arg8[%30, %c0_18, %c0_19], %33 {strides = array<i32>} : memref<8x8x128xf32, #tpu.memory_space<vmem>>, vector<1x8x128xf32>,
    %34 = vector.extract_strided_slice %17 {offsets = [0, 0], sizes = [8, 32], strides = [1, 1]} : vector<8x128xf32> to vector<8x32xf32>
    %c0_20 = arith.constant 0 : index
    %c16 = arith.constant 16 : index
    %35 = vector.load %arg10[%c0_20, %c16] : memref<8x48xf32, #tpu.memory_space<vmem>>, vector<8x32xf32>
    tpu.vector_store %arg10[%c0_20, %c16], %34 {strides = array<i32>} : memref<8x48xf32, #tpu.memory_space<vmem>>, vector<8x32xf32>,
    %c1_i32 = arith.constant 1 : i32
    %36 = arith.index_cast %c1_i32 : i32 to index
    %c0_21 = arith.constant 0 : index
    %c0_22 = arith.constant 0 : index
    %37 = vector.load %arg3[%36, %c0_21, %c0_22] : memref<8x8x16xf32, #tpu.memory_space<vmem>>, vector<1x8x16xf32>
    %38 = vector.shape_cast %37 : vector<1x8x16xf32> to vector<8x16xf32>
    %c0_23 = arith.constant 0 : index
    %c0_24 = arith.constant 0 : index
    %39 = vector.load %arg10[%c0_23, %c0_24] : memref<8x48xf32, #tpu.memory_space<vmem>>, vector<8x16xf32>
    tpu.vector_store %arg10[%c0_23, %c0_24], %38 {strides = array<i32>} : memref<8x48xf32, #tpu.memory_space<vmem>>, vector<8x16xf32>,
    %c0_25 = arith.constant 0 : index
    %c0_26 = arith.constant 0 : index
    %40 = vector.load %arg10[%c0_25, %c0_26] : memref<8x48xf32, #tpu.memory_space<vmem>>, vector<8x48xf32>
    %cst_27 = arith.constant dense<0.000000e+00> : vector<8x128xf32>
    %41 = tpu.matmul %40, %3, %cst_27 {dimension_numbers = #tpu.dot_dimension_numbers<[1], [0], [0], [1], [0, 0, 1, 1], [], []>} : vector<8x48xf32>, vector<48x128xf32>, vector<8x128xf32> -> vector<8x128xf32>
    %42 = arith.addf %41, %7 : vector<8x128xf32>
    %cst_28 = arith.constant dense<0.000000e+00> : vector<8x128xf32>
    %43 = tpu.matmul %42, %4, %cst_28 {dimension_numbers = #tpu.dot_dimension_numbers<[1], [0], [0], [1], [0, 0, 1, 1], [], []>} : vector<8x128xf32>, vector<128x128xf32>, vector<8x128xf32> -> vector<8x128xf32>
    %44 = arith.addf %43, %10 : vector<8x128xf32>
    %cst_29 = arith.constant dense<0xFF800000> : vector<8xf32>
    %45 = vector.multi_reduction <maximumf>, %44, %cst_29 [1] : vector<8x128xf32> to vector<8xf32>
    %46 = vector.shape_cast %45 : vector<8xf32> to vector<8x1xf32>
    %47 = vector.broadcast %46 : vector<8x1xf32> to vector<8x128xf32>
    %48 = arith.subf %44, %47 : vector<8x128xf32>
    %49 = math.exp %48 : vector<8x128xf32>
    %cst_30 = arith.constant dense<0.000000e+00> : vector<8xf32>
    %50 = vector.multi_reduction <add>, %49, %cst_30 [1] : vector<8x128xf32> to vector<8xf32>
    %51 = vector.shape_cast %50 : vector<8xf32> to vector<8x1xf32>
    %52 = math.log %51 : vector<8x1xf32>
    %53 = vector.broadcast %52 : vector<8x1xf32> to vector<8x128xf32>
    %54 = arith.subf %48, %53 : vector<8x128xf32>
    %55 = arith.index_cast %c1_i32 : i32 to index
    %c0_31 = arith.constant 0 : index
    %c0_32 = arith.constant 0 : index
    %56 = vector.load %arg8[%55, %c0_31, %c0_32] : memref<8x8x128xf32, #tpu.memory_space<vmem>>, vector<1x8x128xf32>
    %57 = vector.shape_cast %56 : vector<1x8x128xf32> to vector<8x128xf32>
    %58 = vector.shape_cast %54 : vector<8x128xf32> to vector<1x8x128xf32>
    tpu.vector_store %arg8[%55, %c0_31, %c0_32], %58 {strides = array<i32>} : memref<8x8x128xf32, #tpu.memory_space<vmem>>, vector<1x8x128xf32>,
    %59 = vector.extract_strided_slice %42 {offsets = [0, 0], sizes = [8, 32], strides = [1, 1]} : vector<8x128xf32> to vector<8x32xf32>
    %c0_33 = arith.constant 0 : index
    %c16_34 = arith.constant 16 : index
    %60 = vector.load %arg10[%c0_33, %c16_34] : memref<8x48xf32, #tpu.memory_space<vmem>>, vector<8x32xf32>
    tpu.vector_store %arg10[%c0_33, %c16_34], %59 {strides = array<i32>} : memref<8x48xf32, #tpu.memory_space<vmem>>, vector<8x32xf32>,
    %c2_i32 = arith.constant 2 : i32
    %61 = arith.index_cast %c2_i32 : i32 to index
    %c0_35 = arith.constant 0 : index
    %c0_36 = arith.constant 0 : index
    %62 = vector.load %arg3[%61, %c0_35, %c0_36] : memref<8x8x16xf32, #tpu.memory_space<vmem>>, vector<1x8x16xf32>
    %63 = vector.shape_cast %62 : vector<1x8x16xf32> to vector<8x16xf32>
    %c0_37 = arith.constant 0 : index
    %c0_38 = arith.constant 0 : index
    %64 = vector.load %arg10[%c0_37, %c0_38] : memref<8x48xf32, #tpu.memory_space<vmem>>, vector<8x16xf32>
    tpu.vector_store %arg10[%c0_37, %c0_38], %63 {strides = array<i32>} : memref<8x48xf32, #tpu.memory_space<vmem>>, vector<8x16xf32>,
    %c0_39 = arith.constant 0 : index
    %c0_40 = arith.constant 0 : index
    %65 = vector.load %arg10[%c0_39, %c0_40] : memref<8x48xf32, #tpu.memory_space<vmem>>, vector<8x48xf32>
    %cst_41 = arith.constant dense<0.000000e+00> : vector<8x128xf32>
    %66 = tpu.matmul %65, %3, %cst_41 {dimension_numbers = #tpu.dot_dimension_numbers<[1], [0], [0], [1], [0, 0, 1, 1], [], []>} : vector<8x48xf32>, vector<48x128xf32>, vector<8x128xf32> -> vector<8x128xf32>
    %67 = arith.addf %66, %7 : vector<8x128xf32>
    %cst_42 = arith.constant dense<0.000000e+00> : vector<8x128xf32>
    %68 = tpu.matmul %67, %4, %cst_42 {dimension_numbers = #tpu.dot_dimension_numbers<[1], [0], [0], [1], [0, 0, 1, 1], [], []>} : vector<8x128xf32>, vector<128x128xf32>, vector<8x128xf32> -> vector<8x128xf32>
    %69 = arith.addf %68, %10 : vector<8x128xf32>
    %cst_43 = arith.constant dense<0xFF800000> : vector<8xf32>
    %70 = vector.multi_reduction <maximumf>, %69, %cst_43 [1] : vector<8x128xf32> to vector<8xf32>
    %71 = vector.shape_cast %70 : vector<8xf32> to vector<8x1xf32>
    %72 = vector.broadcast %71 : vector<8x1xf32> to vector<8x128xf32>
    %73 = arith.subf %69, %72 : vector<8x128xf32>
    %74 = math.exp %73 : vector<8x128xf32>
    %cst_44 = arith.constant dense<0.000000e+00> : vector<8xf32>
    %75 = vector.multi_reduction <add>, %74, %cst_44 [1] : vector<8x128xf32> to vector<8xf32>
    %76 = vector.shape_cast %75 : vector<8xf32> to vector<8x1xf32>
    %77 = math.log %76 : vector<8x1xf32>
    %78 = vector.broadcast %77 : vector<8x1xf32> to vector<8x128xf32>
    %79 = arith.subf %73, %78 : vector<8x128xf32>
    %80 = arith.index_cast %c2_i32 : i32 to index
    %c0_45 = arith.constant 0 : index
    %c0_46 = arith.constant 0 : index
    %81 = vector.load %arg8[%80, %c0_45, %c0_46] : memref<8x8x128xf32, #tpu.memory_space<vmem>>, vector<1x8x128xf32>
    %82 = vector.shape_cast %81 : vector<1x8x128xf32> to vector<8x128xf32>
    %83 = vector.shape_cast %79 : vector<8x128xf32> to vector<1x8x128xf32>
    tpu.vector_store %arg8[%80, %c0_45, %c0_46], %83 {strides = array<i32>} : memref<8x8x128xf32, #tpu.memory_space<vmem>>, vector<1x8x128xf32>,
    %84 = vector.extract_strided_slice %67 {offsets = [0, 0], sizes = [8, 32], strides = [1, 1]} : vector<8x128xf32> to vector<8x32xf32>
    %c0_47 = arith.constant 0 : index
    %c16_48 = arith.constant 16 : index
    %85 = vector.load %arg10[%c0_47, %c16_48] : memref<8x48xf32, #tpu.memory_space<vmem>>, vector<8x32xf32>
    tpu.vector_store %arg10[%c0_47, %c16_48], %84 {strides = array<i32>} : memref<8x48xf32, #tpu.memory_space<vmem>>, vector<8x32xf32>,
    %c3_i32 = arith.constant 3 : i32
    %86 = arith.index_cast %c3_i32 : i32 to index
    %c0_49 = arith.constant 0 : index
    %c0_50 = arith.constant 0 : index
    %87 = vector.load %arg3[%86, %c0_49, %c0_50] : memref<8x8x16xf32, #tpu.memory_space<vmem>>, vector<1x8x16xf32>
    %88 = vector.shape_cast %87 : vector<1x8x16xf32> to vector<8x16xf32>
    %c0_51 = arith.constant 0 : index
    %c0_52 = arith.constant 0 : index
    %89 = vector.load %arg10[%c0_51, %c0_52] : memref<8x48xf32, #tpu.memory_space<vmem>>, vector<8x16xf32>
    tpu.vector_store %arg10[%c0_51, %c0_52], %88 {strides = array<i32>} : memref<8x48xf32, #tpu.memory_space<vmem>>, vector<8x16xf32>,
    %c0_53 = arith.constant 0 : index
    %c0_54 = arith.constant 0 : index
    %90 = vector.load %arg10[%c0_53, %c0_54] : memref<8x48xf32, #tpu.memory_space<vmem>>, vector<8x48xf32>
    %cst_55 = arith.constant dense<0.000000e+00> : vector<8x128xf32>
    %91 = tpu.matmul %90, %3, %cst_55 {dimension_numbers = #tpu.dot_dimension_numbers<[1], [0], [0], [1], [0, 0, 1, 1], [], []>} : vector<8x48xf32>, vector<48x128xf32>, vector<8x128xf32> -> vector<8x128xf32>
    %92 = arith.addf %91, %7 : vector<8x128xf32>
    %cst_56 = arith.constant dense<0.000000e+00> : vector<8x128xf32>
    %93 = tpu.matmul %92, %4, %cst_56 {dimension_numbers = #tpu.dot_dimension_numbers<[1], [0], [0], [1], [0, 0, 1, 1], [], []>} : vector<8x128xf32>, vector<128x128xf32>, vector<8x128xf32> -> vector<8x128xf32>
    %94 = arith.addf %93, %10 : vector<8x128xf32>
    %cst_57 = arith.constant dense<0xFF800000> : vector<8xf32>
    %95 = vector.multi_reduction <maximumf>, %94, %cst_57 [1] : vector<8x128xf32> to vector<8xf32>
    %96 = vector.shape_cast %95 : vector<8xf32> to vector<8x1xf32>
    %97 = vector.broadcast %96 : vector<8x1xf32> to vector<8x128xf32>
    %98 = arith.subf %94, %97 : vector<8x128xf32>
    %99 = math.exp %98 : vector<8x128xf32>
    %cst_58 = arith.constant dense<0.000000e+00> : vector<8xf32>
    %100 = vector.multi_reduction <add>, %99, %cst_58 [1] : vector<8x128xf32> to vector<8xf32>
    %101 = vector.shape_cast %100 : vector<8xf32> to vector<8x1xf32>
    %102 = math.log %101 : vector<8x1xf32>
    %103 = vector.broadcast %102 : vector<8x1xf32> to vector<8x128xf32>
    %104 = arith.subf %98, %103 : vector<8x128xf32>
    %105 = arith.index_cast %c3_i32 : i32 to index
    %c0_59 = arith.constant 0 : index
    %c0_60 = arith.constant 0 : index
    %106 = vector.load %arg8[%105, %c0_59, %c0_60] : memref<8x8x128xf32, #tpu.memory_space<vmem>>, vector<1x8x128xf32>
    %107 = vector.shape_cast %106 : vector<1x8x128xf32> to vector<8x128xf32>
    %108 = vector.shape_cast %104 : vector<8x128xf32> to vector<1x8x128xf32>
    tpu.vector_store %arg8[%105, %c0_59, %c0_60], %108 {strides = array<i32>} : memref<8x8x128xf32, #tpu.memory_space<vmem>>, vector<1x8x128xf32>,
    %109 = vector.extract_strided_slice %92 {offsets = [0, 0], sizes = [8, 32], strides = [1, 1]} : vector<8x128xf32> to vector<8x32xf32>
    %c0_61 = arith.constant 0 : index
    %c16_62 = arith.constant 16 : index
    %110 = vector.load %arg10[%c0_61, %c16_62] : memref<8x48xf32, #tpu.memory_space<vmem>>, vector<8x32xf32>
    tpu.vector_store %arg10[%c0_61, %c16_62], %109 {strides = array<i32>} : memref<8x48xf32, #tpu.memory_space<vmem>>, vector<8x32xf32>,
    %c4_i32 = arith.constant 4 : i32
    %111 = arith.index_cast %c4_i32 : i32 to index
    %c0_63 = arith.constant 0 : index
    %c0_64 = arith.constant 0 : index
    %112 = vector.load %arg3[%111, %c0_63, %c0_64] : memref<8x8x16xf32, #tpu.memory_space<vmem>>, vector<1x8x16xf32>
    %113 = vector.shape_cast %112 : vector<1x8x16xf32> to vector<8x16xf32>
    %c0_65 = arith.constant 0 : index
    %c0_66 = arith.constant 0 : index
    %114 = vector.load %arg10[%c0_65, %c0_66] : memref<8x48xf32, #tpu.memory_space<vmem>>, vector<8x16xf32>
    tpu.vector_store %arg10[%c0_65, %c0_66], %113 {strides = array<i32>} : memref<8x48xf32, #tpu.memory_space<vmem>>, vector<8x16xf32>,
    %c0_67 = arith.constant 0 : index
    %c0_68 = arith.constant 0 : index
    %115 = vector.load %arg10[%c0_67, %c0_68] : memref<8x48xf32, #tpu.memory_space<vmem>>, vector<8x48xf32>
    %cst_69 = arith.constant dense<0.000000e+00> : vector<8x128xf32>
    %116 = tpu.matmul %115, %3, %cst_69 {dimension_numbers = #tpu.dot_dimension_numbers<[1], [0], [0], [1], [0, 0, 1, 1], [], []>} : vector<8x48xf32>, vector<48x128xf32>, vector<8x128xf32> -> vector<8x128xf32>
    %117 = arith.addf %116, %7 : vector<8x128xf32>
    %cst_70 = arith.constant dense<0.000000e+00> : vector<8x128xf32>
    %118 = tpu.matmul %117, %4, %cst_70 {dimension_numbers = #tpu.dot_dimension_numbers<[1], [0], [0], [1], [0, 0, 1, 1], [], []>} : vector<8x128xf32>, vector<128x128xf32>, vector<8x128xf32> -> vector<8x128xf32>
    %119 = arith.addf %118, %10 : vector<8x128xf32>
    %cst_71 = arith.constant dense<0xFF800000> : vector<8xf32>
    %120 = vector.multi_reduction <maximumf>, %119, %cst_71 [1] : vector<8x128xf32> to vector<8xf32>
    %121 = vector.shape_cast %120 : vector<8xf32> to vector<8x1xf32>
    %122 = vector.broadcast %121 : vector<8x1xf32> to vector<8x128xf32>
    %123 = arith.subf %119, %122 : vector<8x128xf32>
    %124 = math.exp %123 : vector<8x128xf32>
    %cst_72 = arith.constant dense<0.000000e+00> : vector<8xf32>
    %125 = vector.multi_reduction <add>, %124, %cst_72 [1] : vector<8x128xf32> to vector<8xf32>
    %126 = vector.shape_cast %125 : vector<8xf32> to vector<8x1xf32>
    %127 = math.log %126 : vector<8x1xf32>
    %128 = vector.broadcast %127 : vector<8x1xf32> to vector<8x128xf32>
    %129 = arith.subf %123, %128 : vector<8x128xf32>
    %130 = arith.index_cast %c4_i32 : i32 to index
    %c0_73 = arith.constant 0 : index
    %c0_74 = arith.constant 0 : index
    %131 = vector.load %arg8[%130, %c0_73, %c0_74] : memref<8x8x128xf32, #tpu.memory_space<vmem>>, vector<1x8x128xf32>
    %132 = vector.shape_cast %131 : vector<1x8x128xf32> to vector<8x128xf32>
    %133 = vector.shape_cast %129 : vector<8x128xf32> to vector<1x8x128xf32>
    tpu.vector_store %arg8[%130, %c0_73, %c0_74], %133 {strides = array<i32>} : memref<8x8x128xf32, #tpu.memory_space<vmem>>, vector<1x8x128xf32>,
    %134 = vector.extract_strided_slice %117 {offsets = [0, 0], sizes = [8, 32], strides = [1, 1]} : vector<8x128xf32> to vector<8x32xf32>
    %c0_75 = arith.constant 0 : index
    %c16_76 = arith.constant 16 : index
    %135 = vector.load %arg10[%c0_75, %c16_76] : memref<8x48xf32, #tpu.memory_space<vmem>>, vector<8x32xf32>
    tpu.vector_store %arg10[%c0_75, %c16_76], %134 {strides = array<i32>} : memref<8x48xf32, #tpu.memory_space<vmem>>, vector<8x32xf32>,
    %c5_i32 = arith.constant 5 : i32
    %136 = arith.index_cast %c5_i32 : i32 to index
    %c0_77 = arith.constant 0 : index
    %c0_78 = arith.constant 0 : index
    %137 = vector.load %arg3[%136, %c0_77, %c0_78] : memref<8x8x16xf32, #tpu.memory_space<vmem>>, vector<1x8x16xf32>
    %138 = vector.shape_cast %137 : vector<1x8x16xf32> to vector<8x16xf32>
    %c0_79 = arith.constant 0 : index
    %c0_80 = arith.constant 0 : index
    %139 = vector.load %arg10[%c0_79, %c0_80] : memref<8x48xf32, #tpu.memory_space<vmem>>, vector<8x16xf32>
    tpu.vector_store %arg10[%c0_79, %c0_80], %138 {strides = array<i32>} : memref<8x48xf32, #tpu.memory_space<vmem>>, vector<8x16xf32>,
    %c0_81 = arith.constant 0 : index
    %c0_82 = arith.constant 0 : index
    %140 = vector.load %arg10[%c0_81, %c0_82] : memref<8x48xf32, #tpu.memory_space<vmem>>, vector<8x48xf32>
    %cst_83 = arith.constant dense<0.000000e+00> : vector<8x128xf32>
    %141 = tpu.matmul %140, %3, %cst_83 {dimension_numbers = #tpu.dot_dimension_numbers<[1], [0], [0], [1], [0, 0, 1, 1], [], []>} : vector<8x48xf32>, vector<48x128xf32>, vector<8x128xf32> -> vector<8x128xf32>
    %142 = arith.addf %141, %7 : vector<8x128xf32>
    %cst_84 = arith.constant dense<0.000000e+00> : vector<8x128xf32>
    %143 = tpu.matmul %142, %4, %cst_84 {dimension_numbers = #tpu.dot_dimension_numbers<[1], [0], [0], [1], [0, 0, 1, 1], [], []>} : vector<8x128xf32>, vector<128x128xf32>, vector<8x128xf32> -> vector<8x128xf32>
    %144 = arith.addf %143, %10 : vector<8x128xf32>
    %cst_85 = arith.constant dense<0xFF800000> : vector<8xf32>
    %145 = vector.multi_reduction <maximumf>, %144, %cst_85 [1] : vector<8x128xf32> to vector<8xf32>
    %146 = vector.shape_cast %145 : vector<8xf32> to vector<8x1xf32>
    %147 = vector.broadcast %146 : vector<8x1xf32> to vector<8x128xf32>
    %148 = arith.subf %144, %147 : vector<8x128xf32>
    %149 = math.exp %148 : vector<8x128xf32>
    %cst_86 = arith.constant dense<0.000000e+00> : vector<8xf32>
    %150 = vector.multi_reduction <add>, %149, %cst_86 [1] : vector<8x128xf32> to vector<8xf32>
    %151 = vector.shape_cast %150 : vector<8xf32> to vector<8x1xf32>
    %152 = math.log %151 : vector<8x1xf32>
    %153 = vector.broadcast %152 : vector<8x1xf32> to vector<8x128xf32>
    %154 = arith.subf %148, %153 : vector<8x128xf32>
    %155 = arith.index_cast %c5_i32 : i32 to index
    %c0_87 = arith.constant 0 : index
    %c0_88 = arith.constant 0 : index
    %156 = vector.load %arg8[%155, %c0_87, %c0_88] : memref<8x8x128xf32, #tpu.memory_space<vmem>>, vector<1x8x128xf32>
    %157 = vector.shape_cast %156 : vector<1x8x128xf32> to vector<8x128xf32>
    %158 = vector.shape_cast %154 : vector<8x128xf32> to vector<1x8x128xf32>
    tpu.vector_store %arg8[%155, %c0_87, %c0_88], %158 {strides = array<i32>} : memref<8x8x128xf32, #tpu.memory_space<vmem>>, vector<1x8x128xf32>,
    %159 = vector.extract_strided_slice %142 {offsets = [0, 0], sizes = [8, 32], strides = [1, 1]} : vector<8x128xf32> to vector<8x32xf32>
    %c0_89 = arith.constant 0 : index
    %c16_90 = arith.constant 16 : index
    %160 = vector.load %arg10[%c0_89, %c16_90] : memref<8x48xf32, #tpu.memory_space<vmem>>, vector<8x32xf32>
    tpu.vector_store %arg10[%c0_89, %c16_90], %159 {strides = array<i32>} : memref<8x48xf32, #tpu.memory_space<vmem>>, vector<8x32xf32>,
    %c6_i32 = arith.constant 6 : i32
    %161 = arith.index_cast %c6_i32 : i32 to index
    %c0_91 = arith.constant 0 : index
    %c0_92 = arith.constant 0 : index
    %162 = vector.load %arg3[%161, %c0_91, %c0_92] : memref<8x8x16xf32, #tpu.memory_space<vmem>>, vector<1x8x16xf32>
    %163 = vector.shape_cast %162 : vector<1x8x16xf32> to vector<8x16xf32>
    %c0_93 = arith.constant 0 : index
    %c0_94 = arith.constant 0 : index
    %164 = vector.load %arg10[%c0_93, %c0_94] : memref<8x48xf32, #tpu.memory_space<vmem>>, vector<8x16xf32>
    tpu.vector_store %arg10[%c0_93, %c0_94], %163 {strides = array<i32>} : memref<8x48xf32, #tpu.memory_space<vmem>>, vector<8x16xf32>,
    %c0_95 = arith.constant 0 : index
    %c0_96 = arith.constant 0 : index
    %165 = vector.load %arg10[%c0_95, %c0_96] : memref<8x48xf32, #tpu.memory_space<vmem>>, vector<8x48xf32>
    %cst_97 = arith.constant dense<0.000000e+00> : vector<8x128xf32>
    %166 = tpu.matmul %165, %3, %cst_97 {dimension_numbers = #tpu.dot_dimension_numbers<[1], [0], [0], [1], [0, 0, 1, 1], [], []>} : vector<8x48xf32>, vector<48x128xf32>, vector<8x128xf32> -> vector<8x128xf32>
    %167 = arith.addf %166, %7 : vector<8x128xf32>
    %cst_98 = arith.constant dense<0.000000e+00> : vector<8x128xf32>
    %168 = tpu.matmul %167, %4, %cst_98 {dimension_numbers = #tpu.dot_dimension_numbers<[1], [0], [0], [1], [0, 0, 1, 1], [], []>} : vector<8x128xf32>, vector<128x128xf32>, vector<8x128xf32> -> vector<8x128xf32>
    %169 = arith.addf %168, %10 : vector<8x128xf32>
    %cst_99 = arith.constant dense<0xFF800000> : vector<8xf32>
    %170 = vector.multi_reduction <maximumf>, %169, %cst_99 [1] : vector<8x128xf32> to vector<8xf32>
    %171 = vector.shape_cast %170 : vector<8xf32> to vector<8x1xf32>
    %172 = vector.broadcast %171 : vector<8x1xf32> to vector<8x128xf32>
    %173 = arith.subf %169, %172 : vector<8x128xf32>
    %174 = math.exp %173 : vector<8x128xf32>
    %cst_100 = arith.constant dense<0.000000e+00> : vector<8xf32>
    %175 = vector.multi_reduction <add>, %174, %cst_100 [1] : vector<8x128xf32> to vector<8xf32>
    %176 = vector.shape_cast %175 : vector<8xf32> to vector<8x1xf32>
    %177 = math.log %176 : vector<8x1xf32>
    %178 = vector.broadcast %177 : vector<8x1xf32> to vector<8x128xf32>
    %179 = arith.subf %173, %178 : vector<8x128xf32>
    %180 = arith.index_cast %c6_i32 : i32 to index
    %c0_101 = arith.constant 0 : index
    %c0_102 = arith.constant 0 : index
    %181 = vector.load %arg8[%180, %c0_101, %c0_102] : memref<8x8x128xf32, #tpu.memory_space<vmem>>, vector<1x8x128xf32>
    %182 = vector.shape_cast %181 : vector<1x8x128xf32> to vector<8x128xf32>
    %183 = vector.shape_cast %179 : vector<8x128xf32> to vector<1x8x128xf32>
    tpu.vector_store %arg8[%180, %c0_101, %c0_102], %183 {strides = array<i32>} : memref<8x8x128xf32, #tpu.memory_space<vmem>>, vector<1x8x128xf32>,
    %184 = vector.extract_strided_slice %167 {offsets = [0, 0], sizes = [8, 32], strides = [1, 1]} : vector<8x128xf32> to vector<8x32xf32>
    %c0_103 = arith.constant 0 : index
    %c16_104 = arith.constant 16 : index
    %185 = vector.load %arg10[%c0_103, %c16_104] : memref<8x48xf32, #tpu.memory_space<vmem>>, vector<8x32xf32>
    tpu.vector_store %arg10[%c0_103, %c16_104], %184 {strides = array<i32>} : memref<8x48xf32, #tpu.memory_space<vmem>>, vector<8x32xf32>,
    %c7_i32 = arith.constant 7 : i32
    %186 = arith.index_cast %c7_i32 : i32 to index
    %c0_105 = arith.constant 0 : index
    %c0_106 = arith.constant 0 : index
    %187 = vector.load %arg3[%186, %c0_105, %c0_106] : memref<8x8x16xf32, #tpu.memory_space<vmem>>, vector<1x8x16xf32>
    %188 = vector.shape_cast %187 : vector<1x8x16xf32> to vector<8x16xf32>
    %c0_107 = arith.constant 0 : index
    %c0_108 = arith.constant 0 : index
    %189 = vector.load %arg10[%c0_107, %c0_108] : memref<8x48xf32, #tpu.memory_space<vmem>>, vector<8x16xf32>
    tpu.vector_store %arg10[%c0_107, %c0_108], %188 {strides = array<i32>} : memref<8x48xf32, #tpu.memory_space<vmem>>, vector<8x16xf32>,
    %c0_109 = arith.constant 0 : index
    %c0_110 = arith.constant 0 : index
    %190 = vector.load %arg10[%c0_109, %c0_110] : memref<8x48xf32, #tpu.memory_space<vmem>>, vector<8x48xf32>
    %cst_111 = arith.constant dense<0.000000e+00> : vector<8x128xf32>
    %191 = tpu.matmul %190, %3, %cst_111 {dimension_numbers = #tpu.dot_dimension_numbers<[1], [0], [0], [1], [0, 0, 1, 1], [], []>} : vector<8x48xf32>, vector<48x128xf32>, vector<8x128xf32> -> vector<8x128xf32>
    %192 = arith.addf %191, %7 : vector<8x128xf32>
    %cst_112 = arith.constant dense<0.000000e+00> : vector<8x128xf32>
    %193 = tpu.matmul %192, %4, %cst_112 {dimension_numbers = #tpu.dot_dimension_numbers<[1], [0], [0], [1], [0, 0, 1, 1], [], []>} : vector<8x128xf32>, vector<128x128xf32>, vector<8x128xf32> -> vector<8x128xf32>
    %194 = arith.addf %193, %10 : vector<8x128xf32>
    %cst_113 = arith.constant dense<0xFF800000> : vector<8xf32>
    %195 = vector.multi_reduction <maximumf>, %194, %cst_113 [1] : vector<8x128xf32> to vector<8xf32>
    %196 = vector.shape_cast %195 : vector<8xf32> to vector<8x1xf32>
    %197 = vector.broadcast %196 : vector<8x1xf32> to vector<8x128xf32>
    %198 = arith.subf %194, %197 : vector<8x128xf32>
    %199 = math.exp %198 : vector<8x128xf32>
    %cst_114 = arith.constant dense<0.000000e+00> : vector<8xf32>
    %200 = vector.multi_reduction <add>, %199, %cst_114 [1] : vector<8x128xf32> to vector<8xf32>
    %201 = vector.shape_cast %200 : vector<8xf32> to vector<8x1xf32>
    %202 = math.log %201 : vector<8x1xf32>
    %203 = vector.broadcast %202 : vector<8x1xf32> to vector<8x128xf32>
    %204 = arith.subf %198, %203 : vector<8x128xf32>
    %205 = arith.index_cast %c7_i32 : i32 to index
    %c0_115 = arith.constant 0 : index
    %c0_116 = arith.constant 0 : index
    %206 = vector.load %arg8[%205, %c0_115, %c0_116] : memref<8x8x128xf32, #tpu.memory_space<vmem>>, vector<1x8x128xf32>
    %207 = vector.shape_cast %206 : vector<1x8x128xf32> to vector<8x128xf32>
    %208 = vector.shape_cast %204 : vector<8x128xf32> to vector<1x8x128xf32>
    tpu.vector_store %arg8[%205, %c0_115, %c0_116], %208 {strides = array<i32>} : memref<8x8x128xf32, #tpu.memory_space<vmem>>, vector<1x8x128xf32>,
    %209 = vector.extract_strided_slice %192 {offsets = [0, 0], sizes = [8, 32], strides = [1, 1]} : vector<8x128xf32> to vector<8x32xf32>
    %c0_117 = arith.constant 0 : index
    %c16_118 = arith.constant 16 : index
    %210 = vector.load %arg10[%c0_117, %c16_118] : memref<8x48xf32, #tpu.memory_space<vmem>>, vector<8x32xf32>
    tpu.vector_store %arg10[%c0_117, %c16_118], %209 {strides = array<i32>} : memref<8x48xf32, #tpu.memory_space<vmem>>, vector<8x32xf32>,
    %c8_i32 = arith.constant 8 : i32
    %c0_119 = arith.constant 0 : index
    %c16_120 = arith.constant 16 : index
    %211 = vector.load %arg10[%c0_119, %c16_120] : memref<8x48xf32, #tpu.memory_space<vmem>>, vector<8x32xf32>
    %c0_121 = arith.constant 0 : index
    %c0_122 = arith.constant 0 : index
    %212 = vector.load %arg9[%c0_121, %c0_122] : memref<8x32xf32, #tpu.memory_space<vmem>>, vector<8x32xf32>
    tpu.vector_store %arg9[%c0_121, %c0_122], %211 {strides = array<i32>} : memref<8x32xf32, #tpu.memory_space<vmem>>, vector<8x32xf32>,
    return
  }
  func.func @transform_0(%arg0: i32, %arg1: i32) -> (i32, i32) {
    %c0_i32 = arith.constant 0 : i32
    %c0_i32_0 = arith.constant 0 : i32
    return %arg0, %c0_i32 : i32, i32
  }
  func.func @transform_1(%arg0: i32, %arg1: i32) -> (i32, i32, i32) {
    %c0_i32 = arith.constant 0 : i32
    %c0_i32_0 = arith.constant 0 : i32
    return %arg1, %arg0, %c0_i32 : i32, i32, i32
  }
  func.func @transform_2(%arg0: i32, %arg1: i32) -> (i32, i32) {
    %c0_i32 = arith.constant 0 : i32
    %c0_i32_0 = arith.constant 0 : i32
    %c0_i32_1 = arith.constant 0 : i32
    return %c0_i32, %c0_i32_0 : i32, i32
  }
  func.func @transform_3(%arg0: i32, %arg1: i32) -> (i32, i32) {
    %c0_i32 = arith.constant 0 : i32
    %c0_i32_0 = arith.constant 0 : i32
    %c0_i32_1 = arith.constant 0 : i32
    return %c0_i32, %c0_i32_0 : i32, i32
  }
  func.func @transform_4(%arg0: i32, %arg1: i32) -> (i32, i32) {
    %c0_i32 = arith.constant 0 : i32
    %c0_i32_0 = arith.constant 0 : i32
    %c0_i32_1 = arith.constant 0 : i32
    return %c0_i32, %c0_i32_0 : i32, i32
  }
  func.func @transform_5(%arg0: i32, %arg1: i32) -> (i32, i32) {
    %c0_i32 = arith.constant 0 : i32
    %c0_i32_0 = arith.constant 0 : i32
    %c0_i32_1 = arith.constant 0 : i32
    return %c0_i32, %c0_i32_0 : i32, i32
  }
  func.func @transform_6(%arg0: i32, %arg1: i32) -> (i32, i32, i32) {
    %c0_i32 = arith.constant 0 : i32
    %c0_i32_0 = arith.constant 0 : i32
    return %arg1, %arg0, %c0_i32 : i32, i32, i32
  }
  func.func @transform_7(%arg0: i32, %arg1: i32) -> (i32, i32) {
    %c0_i32 = arith.constant 0 : i32
    %c0_i32_0 = arith.constant 0 : i32
    return %arg0, %c0_i32 : i32, i32
  }
}

</mosaic_0001>

<llo_original>
// kernel: tpu_custom_call.1
$region0: #{tpu_custom_call.1}
  #allocation0 [shape = 'u32[]', space=smem, size = 0x4, offset = 0x4, fixed_abs, tag = 'smem constant byte address 0x4 - core index']
  #allocation1 [shape = 'u32[72,128]{1,0:T(1,128)}', space=vmem, size = 0x9000, scoped, tag = 'internal scratch']
  #allocation2 [shape = 'f32[8,48]{1,0:T(8,128)}', space=vmem, size = 0x1000, scoped, tag = 'scratch operand']
  %s0 = inlined_call_operand.hbm [shape: f32[8,32], index: 0, kind: input, shape index: {}]
  %s1 = inlined_call_operand.hbm [shape: f32[8,8,16], index: 1, kind: input, shape index: {}]
  %s2 = inlined_call_operand.hbm [shape: f32[48,128], index: 2, kind: input, shape index: {}]
  %s3 = inlined_call_operand.vmem [shape: f32[1,128], index: 3, kind: input, shape index: {}]
  %s4 = inlined_call_operand.hbm [shape: f32[128,128], index: 4, kind: input, shape index: {}]
  %s5 = inlined_call_operand.vmem [shape: f32[1,128], index: 5, kind: input, shape index: {}]
  %s6 = inlined_call_operand.hbm [shape: f32[8,8,128], index: 6, kind: output, shape index: {0}]
  %s7 = inlined_call_operand.hbm [shape: f32[8,32], index: 7, kind: output, shape index: {1}]
  %8 = xla_tuple %s6, %s7
  %s9 = sld [smem:[#allocation0]]
  $region62: #{tpu_custom_call.1} parent=0
    _
  %s11 = ssub.s32 1, %s9
  %s12 = scalar_select 0, %s11, %s9
  $region1: #{tpu_custom_call.1} parent=0
    #allocation3 [shape = 'u8[4096]{0}', space=vmem, size = 0x1000, scoped, tag = 'input window, operand 0, single buffered']
    #allocation4 [shape = 's32[1]{0}', space=sflag, size = 0x4, scoped, tag = 'scoped memory for tpu_custom_call.1']
    #allocation5 [shape = 's32[1]{0}', space=sflag, size = 0x4, scoped, tag = 'scoped memory for tpu_custom_call.1']
    #allocation6 [shape = 'u8[32768]{0}', space=vmem, size = 0x8000, scoped, tag = 'input window, operand 1, single buffered']
    #allocation7 [shape = 's32[1]{0}', space=sflag, size = 0x4, scoped, tag = 'scoped memory for tpu_custom_call.1']
    #allocation8 [shape = 'u8[24576]{0}', space=vmem, size = 0x6000, scoped, tag = 'input window, operand 2, single buffered']
    #allocation9 [shape = 'u8[65536]{0}', space=vmem, size = 0x10000, scoped, tag = 'input window, operand 4, single buffered']
    #allocation10 [shape = 's32[1]{0}', space=sflag, size = 0x4, scoped, tag = 'scoped memory for tpu_custom_call.1']
    #allocation11 [shape = 'u8[32768]{0}', space=vmem, size = 0x8000, scoped, tag = 'output window, operand 0, single buffered']
    #allocation12 [shape = 'u8[4096]{0}', space=vmem, size = 0x1000, scoped, tag = 'output window, operand 1, single buffered']
    #allocation13 [shape = 's32[1]{0}', space=sflag, size = 0x4, scoped, tag = 'scoped memory for tpu_custom_call.1']
    %13 = vsyncpa [#allocation4], 0
    %14 = vsyncpa [#allocation7], 0
    %15 = vsyncpa [#allocation10], 0
    %16 = vsyncpa [#allocation5], 0
    %17 = vsyncpa [#allocation13], 0
    // Predicated region
    $region2: #{tpu_custom_call.1} parent=1 // pred_check
      _
    $region3: #{tpu_custom_call.1} parent=1 // pred_check_branch
      %19 = sbr.rel (0) target = $region5
    $region4: #{tpu_custom_call.1} parent=1 // pred_region
      %21 = vsyncadd [#allocation4], 0
      %s23 = sshll.u32 %s0, 4
      %s24 = int_to_ptr.hbm [resolvable:$true] %s23
      %s25 = sshll.u32 [#allocation3], 4
      %s26 = int_to_ptr.vmem [resolvable:$true] %s25
      %28 = dma.hbm_to_vmem [thread:$0]  %s24, 128, %s26, [#allocation4]
    $region5: #{tpu_custom_call.1} parent=1 // pred_fallthru
      _
    // Predicated region
    $region6: #{tpu_custom_call.1} parent=1 // pred_check
      _
    $region7: #{tpu_custom_call.1} parent=1 // pred_check_branch
      %30 = sbr.rel (0) target = $region9
    $region8: #{tpu_custom_call.1} parent=1 // pred_region
      %32 = vsyncadd [#allocation7], 0
      %s33 = sshll.u32 %s1, 4
      %s34 = int_to_ptr.hbm [resolvable:$true] %s33
      %s35 = sshll.u32 [#allocation6], 4
      %s36 = int_to_ptr.vmem [resolvable:$true] %s35
      %41 = dma.hbm_to_vmem [thread:$0]  %s34, 1024, %s36, [#allocation7], 128, 128, 8
    $region9: #{tpu_custom_call.1} parent=1 // pred_fallthru
      _
    // Predicated region
    $region10: #{tpu_custom_call.1} parent=1 // pred_check
      _
    $region11: #{tpu_custom_call.1} parent=1 // pred_check_branch
      %43 = sbr.rel (0) target = $region13
    $region12: #{tpu_custom_call.1} parent=1 // pred_region
      %45 = vsyncadd [#allocation7], 0
      %s46 = sshll.u32 %s2, 4
      %s47 = int_to_ptr.hbm [resolvable:$true] %s46
      %s48 = sshll.u32 [#allocation8], 4
      %s49 = int_to_ptr.vmem [resolvable:$true] %s48
      %54 = dma.hbm_to_vmem [thread:$0]  %s47, 768, %s49, [#allocation7], 128, 128, 8
    $region13: #{tpu_custom_call.1} parent=1 // pred_fallthru
      _
    // Predicated region
    $region14: #{tpu_custom_call.1} parent=1 // pred_check
      _
    $region15: #{tpu_custom_call.1} parent=1 // pred_check_branch
      %56 = sbr.rel (0) target = $region17
    $region16: #{tpu_custom_call.1} parent=1 // pred_region
      _
    $region17: #{tpu_custom_call.1} parent=1 // pred_fallthru
      _
    // Predicated region
    $region18: #{tpu_custom_call.1} parent=1 // pred_check
      _
    $region19: #{tpu_custom_call.1} parent=1 // pred_check_branch
      %58 = sbr.rel (0) target = $region21
    $region20: #{tpu_custom_call.1} parent=1 // pred_region
      %60 = vsyncadd [#allocation10], 0
      %s61 = sshll.u32 %s4, 4
      %s62 = int_to_ptr.hbm [resolvable:$true] %s61
      %s63 = sshll.u32 [#allocation9], 4
      %s64 = int_to_ptr.vmem [resolvable:$true] %s63
      %69 = dma.hbm_to_vmem [thread:$0]  %s62, 2048, %s64, [#allocation10], 128, 128, 8
    $region21: #{tpu_custom_call.1} parent=1 // pred_fallthru
      _
    // Predicated region
    $region22: #{tpu_custom_call.1} parent=1 // pred_check
      _
    $region23: #{tpu_custom_call.1} parent=1 // pred_check_branch
      %71 = sbr.rel (0) target = $region25
    $region24: #{tpu_custom_call.1} parent=1 // pred_region
      _
    $region25: #{tpu_custom_call.1} parent=1 // pred_fallthru
      _
    // Predicated region
    $region26: #{tpu_custom_call.1} parent=1 // pred_check
      _
    $region27: #{tpu_custom_call.1} parent=1 // pred_check_branch
      %73 = sbr.rel (0) target = $region29
    $region28: #{tpu_custom_call.1} parent=1 // pred_region
      %75 = dma.done [#allocation4], 128
    $region29: #{tpu_custom_call.1} parent=1 // pred_fallthru
      _
    // Predicated region
    $region30: #{tpu_custom_call.1} parent=1 // pred_check
      _
    $region31: #{tpu_custom_call.1} parent=1 // pred_check_branch
      %77 = sbr.rel (0) target = $region33
    $region32: #{tpu_custom_call.1} parent=1 // pred_region
      %79 = dma.done [#allocation7], 1024
    $region33: #{tpu_custom_call.1} parent=1 // pred_fallthru
      _
    // Predicated region
    $region34: #{tpu_custom_call.1} parent=1 // pred_check
      _
    $region35: #{tpu_custom_call.1} parent=1 // pred_check_branch
      %81 = sbr.rel (0) target = $region37
    $region36: #{tpu_custom_call.1} parent=1 // pred_region
      %83 = dma.done [#allocation7], 768
    $region37: #{tpu_custom_call.1} parent=1 // pred_fallthru
      _
    // Predicated region
    $region38: #{tpu_custom_call.1} parent=1 // pred_check
      _
    $region39: #{tpu_custom_call.1} parent=1 // pred_check_branch
      %85 = sbr.rel (0) target = $region41
    $region40: #{tpu_custom_call.1} parent=1 // pred_region
      %87 = dma.done [#allocation10], 2048
    $region41: #{tpu_custom_call.1} parent=1 // pred_fallthru
      _
    %p88 = scmp.eq.s32.totalorder 0, 0
    // Predicated region
    $region42: #{tpu_custom_call.1} parent=1 // pred_check
      %p89 = pneg %p88
    $region43: #{tpu_custom_call.1} parent=1 // pred_check_branch
      %91 = sbr.rel (%p89) target = $region45
    $region44: #{tpu_custom_call.1} parent=1 // pred_region
      %v92 = vld [vmem:[#allocation3] sm:$0xff]
      %94 = vrot.lane.b32.xlu0 %v92, 16
      %v95 = vpop.permute.xlu0 %94
      %vm97 = vcmask 392320
      %98 = vst.msk [vmem:[#allocation2] sm:$0xff] %vm97, %v95
    $region45: #{tpu_custom_call.1} parent=1 // pred_fallthru
      _
    %v99 = vld [vmem:[#allocation8] sm:$0xff]
    %v100 = vld [vmem:[#allocation8 + $0x8] sm:$0xff]
    %v101 = vld [vmem:[#allocation8 + $0x10] sm:$0xff]
    %v102 = vld [vmem:[#allocation8 + $0x18] sm:$0xff]
    %v103 = vld [vmem:[#allocation8 + $0x20] sm:$0xff]
    %v104 = vld [vmem:[#allocation8 + $0x28] sm:$0xff]
    %v105 = vld [vmem:[#allocation9] sm:$0xff]
    %v106 = vld [vmem:[#allocation9 + $0x8] sm:$0xff]
    %v107 = vld [vmem:[#allocation9 + $0x10] sm:$0xff]
    %v108 = vld [vmem:[#allocation9 + $0x18] sm:$0xff]
    %v109 = vld [vmem:[#allocation9 + $0x20] sm:$0xff]
    %v110 = vld [vmem:[#allocation9 + $0x28] sm:$0xff]
    %v111 = vld [vmem:[#allocation9 + $0x30] sm:$0xff]
    %v112 = vld [vmem:[#allocation9 + $0x38] sm:$0xff]
    %v113 = vld [vmem:[#allocation9 + $0x40] sm:$0xff]
    %v114 = vld [vmem:[#allocation9 + $0x48] sm:$0xff]
    %v115 = vld [vmem:[#allocation9 + $0x50] sm:$0xff]
    %v116 = vld [vmem:[#allocation9 + $0x58] sm:$0xff]
    %v117 = vld [vmem:[#allocation9 + $0x60] sm:$0xff]
    %v118 = vld [vmem:[#allocation9 + $0x68] sm:$0xff]
    %v119 = vld [vmem:[#allocation9 + $0x70] sm:$0xff]
    %v120 = vld [vmem:[#allocation9 + $0x78] sm:$0xff]
    %v121 = vld [vmem:[%s3] sm:$0x1]
    %v123 = vperm.slane %v121, 0
    %v125 = vld [vmem:[%s5] sm:$0x1]
    %v127 = vperm.slane %v125, 0
    %v129 = vld [vmem:[#allocation6] sm:$0xff]
    %vm130 = vcmask 130048
    %131 = vst.msk [vmem:[#allocation2] sm:$0xff] %vm130, %v129
    %v132 = vld [vmem:[#allocation2] sm:$0xff]
    %vm133 = vcmask 392192
    %v135 = vsel %vm133, %v132, 0
    %137 = vmatpush.msra.mxu0 0.0
    %138 = vmatpush.msra.mxu0 0.0
    %139 = vmatpush.msra.mxu0 0.0
    %140 = vmatpush.msra.mxu0 0.0
    %141 = vmatpush.msra.mxu0 0.0
    %142 = vmatpush.msra.mxu0 0.0
    %143 = vmatpush.msra.mxu0 0.0
    %144 = vmatpush.msra.mxu0 0.0
    %145 = vmatpush.msra.mxu0 0.0
    %146 = vmatpush.msra.mxu0 0.0
    %147 = vmatpush.msra.mxu0 %v104
    %148 = vmatpush.msra.mxu0 %v103
    %149 = vmatpush.msra.mxu0 %v102
    %150 = vmatpush.msra.mxu0 %v101
    %151 = vmatpush.msra.mxu0 %v100
    %152 = vmatpush.msra.mxu0 %v99
    %153 = vmatmul.f32.gmra.mxu0 %v135
    %v154 = vpop.f32.mrf.mxu0
    %v155 = vadd.f32 %v123, %v154
    %156 = vdwg.mxu0
    %157 = vmatpush.msra.mxu0 %v120
    %158 = vmatpush.msra.mxu0 %v119
    %159 = vmatpush.msra.mxu0 %v118
    %160 = vmatpush.msra.mxu0 %v117
    %161 = vmatpush.msra.mxu0 %v116
    %162 = vmatpush.msra.mxu0 %v115
    %163 = vmatpush.msra.mxu0 %v114
    %164 = vmatpush.msra.mxu0 %v113
    %165 = vmatpush.msra.mxu0 %v112
    %166 = vmatpush.msra.mxu0 %v111
    %167 = vmatpush.msra.mxu0 %v110
    %168 = vmatpush.msra.mxu0 %v109
    %169 = vmatpush.msra.mxu0 %v108
    %170 = vmatpush.msra.mxu0 %v107
    %171 = vmatpush.msra.mxu0 %v106
    %172 = vmatpush.msra.mxu0 %v105
    %173 = vmatmul.f32.gmra.mxu0 %v155
    %v174 = vpop.f32.mrf.mxu0
    %v175 = vadd.f32 %v127, %v174
    %176 = vdwg.mxu0
    %177 = vmax.xlane.f32.xlu0 %v175
    %v178 = vpop.xlane.xlu0 %177
    %v179 = vsub.f32 %v175, %v178
    %v180 = vmul.f32 %v179, 1.442695
    %v181 = vpow.pop %v180
    %182 = vadd.xlane.f32.xlu0 %v181
    %v183 = vpop.xlane.xlu0 %182
    %v184 = vlog2.pop %v183
    %v185 = vmul.f32 %v184, 0.6931472
    %v186 = vsub.f32 %v179, %v185
    %187 = vst [vmem:[#allocation11] sm:$0xff] %v186
    %189 = vrot.lane.b32.xlu0 %v155, 16
    %v190 = vpop.permute.xlu0 %189
    %vm192 = vcmask 392320
    %193 = vst.msk [vmem:[#allocation2] sm:$0xff] %vm192, %v190
    %s194 = scalar_lea.vmem [#allocation6], 8
    %v195 = vld [vmem:[%s194] sm:$0xff]
    %196 = vst.msk [vmem:[#allocation2] sm:$0xff] %vm130, %v195
    %v197 = vld [vmem:[#allocation2] sm:$0xff]
    %v199 = vsel %vm133, %v197, 0
    %201 = vmatpush.msra.mxu0 0.0
    %202 = vmatpush.msra.mxu0 0.0
    %203 = vmatpush.msra.mxu0 0.0
    %204 = vmatpush.msra.mxu0 0.0
    %205 = vmatpush.msra.mxu0 0.0
    %206 = vmatpush.msra.mxu0 0.0
    %207 = vmatpush.msra.mxu0 0.0
    %208 = vmatpush.msra.mxu0 0.0
    %209 = vmatpush.msra.mxu0 0.0
    %210 = vmatpush.msra.mxu0 0.0
    %211 = vmatpush.msra.mxu0 %v104
    %212 = vmatpush.msra.mxu0 %v103
    %213 = vmatpush.msra.mxu0 %v102
    %214 = vmatpush.msra.mxu0 %v101
    %215 = vmatpush.msra.mxu0 %v100
    %216 = vmatpush.msra.mxu0 %v99
    %217 = vmatmul.f32.gmra.mxu0 %v199
    %v218 = vpop.f32.mrf.mxu0
    %v219 = vadd.f32 %v123, %v218
    %220 = vdwg.mxu0
    %221 = vmatpush.msra.mxu0 %v120
    %222 = vmatpush.msra.mxu0 %v119
    %223 = vmatpush.msra.mxu0 %v118
    %224 = vmatpush.msra.mxu0 %v117
    %225 = vmatpush.msra.mxu0 %v116
    %226 = vmatpush.msra.mxu0 %v115
    %227 = vmatpush.msra.mxu0 %v114
    %228 = vmatpush.msra.mxu0 %v113
    %229 = vmatpush.msra.mxu0 %v112
    %230 = vmatpush.msra.mxu0 %v111
    %231 = vmatpush.msra.mxu0 %v110
    %232 = vmatpush.msra.mxu0 %v109
    %233 = vmatpush.msra.mxu0 %v108
    %234 = vmatpush.msra.mxu0 %v107
    %235 = vmatpush.msra.mxu0 %v106
    %236 = vmatpush.msra.mxu0 %v105
    %237 = vmatmul.f32.gmra.mxu0 %v219
    %v238 = vpop.f32.mrf.mxu0
    %v239 = vadd.f32 %v127, %v238
    %240 = vdwg.mxu0
    %241 = vmax.xlane.f32.xlu0 %v239
    %v242 = vpop.xlane.xlu0 %241
    %v243 = vsub.f32 %v239, %v242
    %v244 = vmul.f32 %v243, 1.442695
    %v245 = vpow.pop %v244
    %246 = vadd.xlane.f32.xlu0 %v245
    %v247 = vpop.xlane.xlu0 %246
    %v248 = vlog2.pop %v247
    %v249 = vmul.f32 %v248, 0.6931472
    %v250 = vsub.f32 %v243, %v249
    %s251 = scalar_lea.vmem [#allocation11], 8
    %252 = vst [vmem:[%s251] sm:$0xff] %v250
    %254 = vrot.lane.b32.xlu0 %v219, 16
    %v255 = vpop.permute.xlu0 %254
    %257 = vst.msk [vmem:[#allocation2] sm:$0xff] %vm192, %v255
    %s258 = scalar_lea.vmem [#allocation6], 16
    %v259 = vld [vmem:[%s258] sm:$0xff]
    %260 = vst.msk [vmem:[#allocation2] sm:$0xff] %vm130, %v259
    %v261 = vld [vmem:[#allocation2] sm:$0xff]
    %v263 = vsel %vm133, %v261, 0
    %265 = vmatpush.msra.mxu0 0.0
    %266 = vmatpush.msra.mxu0 0.0
    %267 = vmatpush.msra.mxu0 0.0
    %268 = vmatpush.msra.mxu0 0.0
    %269 = vmatpush.msra.mxu0 0.0
    %270 = vmatpush.msra.mxu0 0.0
    %271 = vmatpush.msra.mxu0 0.0
    %272 = vmatpush.msra.mxu0 0.0
    %273 = vmatpush.msra.mxu0 0.0
    %274 = vmatpush.msra.mxu0 0.0
    %275 = vmatpush.msra.mxu0 %v104
    %276 = vmatpush.msra.mxu0 %v103
    %277 = vmatpush.msra.mxu0 %v102
    %278 = vmatpush.msra.mxu0 %v101
    %279 = vmatpush.msra.mxu0 %v100
    %280 = vmatpush.msra.mxu0 %v99
    %281 = vmatmul.f32.gmra.mxu0 %v263
    %v282 = vpop.f32.mrf.mxu0
    %v283 = vadd.f32 %v123, %v282
    %284 = vdwg.mxu0
    %285 = vmatpush.msra.mxu0 %v120
    %286 = vmatpush.msra.mxu0 %v119
    %287 = vmatpush.msra.mxu0 %v118
    %288 = vmatpush.msra.mxu0 %v117
    %289 = vmatpush.msra.mxu0 %v116
    %290 = vmatpush.msra.mxu0 %v115
    %291 = vmatpush.msra.mxu0 %v114
    %292 = vmatpush.msra.mxu0 %v113
    %293 = vmatpush.msra.mxu0 %v112
    %294 = vmatpush.msra.mxu0 %v111
    %295 = vmatpush.msra.mxu0 %v110
    %296 = vmatpush.msra.mxu0 %v109
    %297 = vmatpush.msra.mxu0 %v108
    %298 = vmatpush.msra.mxu0 %v107
    %299 = vmatpush.msra.mxu0 %v106
    %300 = vmatpush.msra.mxu0 %v105
    %301 = vmatmul.f32.gmra.mxu0 %v283
    %v302 = vpop.f32.mrf.mxu0
    %v303 = vadd.f32 %v127, %v302
    %304 = vdwg.mxu0
    %305 = vmax.xlane.f32.xlu0 %v303
    %v306 = vpop.xlane.xlu0 %305
    %v307 = vsub.f32 %v303, %v306
    %v308 = vmul.f32 %v307, 1.442695
    %v309 = vpow.pop %v308
    %310 = vadd.xlane.f32.xlu0 %v309
    %v311 = vpop.xlane.xlu0 %310
    %v312 = vlog2.pop %v311
    %v313 = vmul.f32 %v312, 0.6931472
    %v314 = vsub.f32 %v307, %v313
    %s315 = scalar_lea.vmem [#allocation11], 16
    %316 = vst [vmem:[%s315] sm:$0xff] %v314
    %318 = vrot.lane.b32.xlu0 %v283, 16
    %v319 = vpop.permute.xlu0 %318
    %321 = vst.msk [vmem:[#allocation2] sm:$0xff] %vm192, %v319
    %s322 = scalar_lea.vmem [#allocation6], 24
    %v323 = vld [vmem:[%s322] sm:$0xff]
    %324 = vst.msk [vmem:[#allocation2] sm:$0xff] %vm130, %v323
    %v325 = vld [vmem:[#allocation2] sm:$0xff]
    %v327 = vsel %vm133, %v325, 0
    %329 = vmatpush.msra.mxu0 0.0
    %330 = vmatpush.msra.mxu0 0.0
    %331 = vmatpush.msra.mxu0 0.0
    %332 = vmatpush.msra.mxu0 0.0
    %333 = vmatpush.msra.mxu0 0.0
    %334 = vmatpush.msra.mxu0 0.0
    %335 = vmatpush.msra.mxu0 0.0
    %336 = vmatpush.msra.mxu0 0.0
    %337 = vmatpush.msra.mxu0 0.0
    %338 = vmatpush.msra.mxu0 0.0
    %339 = vmatpush.msra.mxu0 %v104
    %340 = vmatpush.msra.mxu0 %v103
    %341 = vmatpush.msra.mxu0 %v102
    %342 = vmatpush.msra.mxu0 %v101
    %343 = vmatpush.msra.mxu0 %v100
    %344 = vmatpush.msra.mxu0 %v99
    %345 = vmatmul.f32.gmra.mxu0 %v327
    %v346 = vpop.f32.mrf.mxu0
    %v347 = vadd.f32 %v123, %v346
    %348 = vdwg.mxu0
    %349 = vmatpush.msra.mxu0 %v120
    %350 = vmatpush.msra.mxu0 %v119
    %351 = vmatpush.msra.mxu0 %v118
    %352 = vmatpush.msra.mxu0 %v117
    %353 = vmatpush.msra.mxu0 %v116
    %354 = vmatpush.msra.mxu0 %v115
    %355 = vmatpush.msra.mxu0 %v114
    %356 = vmatpush.msra.mxu0 %v113
    %357 = vmatpush.msra.mxu0 %v112
    %358 = vmatpush.msra.mxu0 %v111
    %359 = vmatpush.msra.mxu0 %v110
    %360 = vmatpush.msra.mxu0 %v109
    %361 = vmatpush.msra.mxu0 %v108
    %362 = vmatpush.msra.mxu0 %v107
    %363 = vmatpush.msra.mxu0 %v106
    %364 = vmatpush.msra.mxu0 %v105
    %365 = vmatmul.f32.gmra.mxu0 %v347
    %v366 = vpop.f32.mrf.mxu0
    %v367 = vadd.f32 %v127, %v366
    %368 = vdwg.mxu0
    %369 = vmax.xlane.f32.xlu0 %v367
    %v370 = vpop.xlane.xlu0 %369
    %v371 = vsub.f32 %v367, %v370
    %v372 = vmul.f32 %v371, 1.442695
    %v373 = vpow.pop %v372
    %374 = vadd.xlane.f32.xlu0 %v373
    %v375 = vpop.xlane.xlu0 %374
    %v376 = vlog2.pop %v375
    %v377 = vmul.f32 %v376, 0.6931472
    %v378 = vsub.f32 %v371, %v377
    %s379 = scalar_lea.vmem [#allocation11], 24
    %380 = vst [vmem:[%s379] sm:$0xff] %v378
    %382 = vrot.lane.b32.xlu0 %v347, 16
    %v383 = vpop.permute.xlu0 %382
    %385 = vst.msk [vmem:[#allocation2] sm:$0xff] %vm192, %v383
    %s386 = scalar_lea.vmem [#allocation6], 32
    %v387 = vld [vmem:[%s386] sm:$0xff]
    %388 = vst.msk [vmem:[#allocation2] sm:$0xff] %vm130, %v387
    %v389 = vld [vmem:[#allocation2] sm:$0xff]
    %v391 = vsel %vm133, %v389, 0
    %393 = vmatpush.msra.mxu0 0.0
    %394 = vmatpush.msra.mxu0 0.0
    %395 = vmatpush.msra.mxu0 0.0
    %396 = vmatpush.msra.mxu0 0.0
    %397 = vmatpush.msra.mxu0 0.0
    %398 = vmatpush.msra.mxu0 0.0
    %399 = vmatpush.msra.mxu0 0.0
    %400 = vmatpush.msra.mxu0 0.0
    %401 = vmatpush.msra.mxu0 0.0
    %402 = vmatpush.msra.mxu0 0.0
    %403 = vmatpush.msra.mxu0 %v104
    %404 = vmatpush.msra.mxu0 %v103
    %405 = vmatpush.msra.mxu0 %v102
    %406 = vmatpush.msra.mxu0 %v101
    %407 = vmatpush.msra.mxu0 %v100
    %408 = vmatpush.msra.mxu0 %v99
    %409 = vmatmul.f32.gmra.mxu0 %v391
    %v410 = vpop.f32.mrf.mxu0
    %v411 = vadd.f32 %v123, %v410
    %412 = vdwg.mxu0
    %413 = vmatpush.msra.mxu0 %v120
    %414 = vmatpush.msra.mxu0 %v119
    %415 = vmatpush.msra.mxu0 %v118
    %416 = vmatpush.msra.mxu0 %v117
    %417 = vmatpush.msra.mxu0 %v116
    %418 = vmatpush.msra.mxu0 %v115
    %419 = vmatpush.msra.mxu0 %v114
    %420 = vmatpush.msra.mxu0 %v113
    %421 = vmatpush.msra.mxu0 %v112
    %422 = vmatpush.msra.mxu0 %v111
    %423 = vmatpush.msra.mxu0 %v110
    %424 = vmatpush.msra.mxu0 %v109
    %425 = vmatpush.msra.mxu0 %v108
    %426 = vmatpush.msra.mxu0 %v107
    %427 = vmatpush.msra.mxu0 %v106
    %428 = vmatpush.msra.mxu0 %v105
    %429 = vmatmul.f32.gmra.mxu0 %v411
    %v430 = vpop.f32.mrf.mxu0
    %v431 = vadd.f32 %v127, %v430
    %432 = vdwg.mxu0
    %433 = vmax.xlane.f32.xlu0 %v431
    %v434 = vpop.xlane.xlu0 %433
    %v435 = vsub.f32 %v431, %v434
    %v436 = vmul.f32 %v435, 1.442695
    %v437 = vpow.pop %v436
    %438 = vadd.xlane.f32.xlu0 %v437
    %v439 = vpop.xlane.xlu0 %438
    %v440 = vlog2.pop %v439
    %v441 = vmul.f32 %v440, 0.6931472
    %v442 = vsub.f32 %v435, %v441
    %s443 = scalar_lea.vmem [#allocation11], 32
    %444 = vst [vmem:[%s443] sm:$0xff] %v442
    %446 = vrot.lane.b32.xlu0 %v411, 16
    %v447 = vpop.permute.xlu0 %446
    %449 = vst.msk [vmem:[#allocation2] sm:$0xff] %vm192, %v447
    %s450 = scalar_lea.vmem [#allocation6], 40
    %v451 = vld [vmem:[%s450] sm:$0xff]
    %452 = vst.msk [vmem:[#allocation2] sm:$0xff] %vm130, %v451
    %v453 = vld [vmem:[#allocation2] sm:$0xff]
    %v455 = vsel %vm133, %v453, 0
    %457 = vmatpush.msra.mxu0 0.0
    %458 = vmatpush.msra.mxu0 0.0
    %459 = vmatpush.msra.mxu0 0.0
    %460 = vmatpush.msra.mxu0 0.0
    %461 = vmatpush.msra.mxu0 0.0
    %462 = vmatpush.msra.mxu0 0.0
    %463 = vmatpush.msra.mxu0 0.0
    %464 = vmatpush.msra.mxu0 0.0
    %465 = vmatpush.msra.mxu0 0.0
    %466 = vmatpush.msra.mxu0 0.0
    %467 = vmatpush.msra.mxu0 %v104
    %468 = vmatpush.msra.mxu0 %v103
    %469 = vmatpush.msra.mxu0 %v102
    %470 = vmatpush.msra.mxu0 %v101
    %471 = vmatpush.msra.mxu0 %v100
    %472 = vmatpush.msra.mxu0 %v99
    %473 = vmatmul.f32.gmra.mxu0 %v455
    %v474 = vpop.f32.mrf.mxu0
    %v475 = vadd.f32 %v123, %v474
    %476 = vdwg.mxu0
    %477 = vmatpush.msra.mxu0 %v120
    %478 = vmatpush.msra.mxu0 %v119
    %479 = vmatpush.msra.mxu0 %v118
    %480 = vmatpush.msra.mxu0 %v117
    %481 = vmatpush.msra.mxu0 %v116
    %482 = vmatpush.msra.mxu0 %v115
    %483 = vmatpush.msra.mxu0 %v114
    %484 = vmatpush.msra.mxu0 %v113
    %485 = vmatpush.msra.mxu0 %v112
    %486 = vmatpush.msra.mxu0 %v111
    %487 = vmatpush.msra.mxu0 %v110
    %488 = vmatpush.msra.mxu0 %v109
    %489 = vmatpush.msra.mxu0 %v108
    %490 = vmatpush.msra.mxu0 %v107
    %491 = vmatpush.msra.mxu0 %v106
    %492 = vmatpush.msra.mxu0 %v105
    %493 = vmatmul.f32.gmra.mxu0 %v475
    %v494 = vpop.f32.mrf.mxu0
    %v495 = vadd.f32 %v127, %v494
    %496 = vdwg.mxu0
    %497 = vmax.xlane.f32.xlu0 %v495
    %v498 = vpop.xlane.xlu0 %497
    %v499 = vsub.f32 %v495, %v498
    %v500 = vmul.f32 %v499, 1.442695
    %v501 = vpow.pop %v500
    %502 = vadd.xlane.f32.xlu0 %v501
    %v503 = vpop.xlane.xlu0 %502
    %v504 = vlog2.pop %v503
    %v505 = vmul.f32 %v504, 0.6931472
    %v506 = vsub.f32 %v499, %v505
    %s507 = scalar_lea.vmem [#allocation11], 40
    %508 = vst [vmem:[%s507] sm:$0xff] %v506
    %510 = vrot.lane.b32.xlu0 %v475, 16
    %v511 = vpop.permute.xlu0 %510
    %513 = vst.msk [vmem:[#allocation2] sm:$0xff] %vm192, %v511
    %s514 = scalar_lea.vmem [#allocation6], 48
    %v515 = vld [vmem:[%s514] sm:$0xff]
    %516 = vst.msk [vmem:[#allocation2] sm:$0xff] %vm130, %v515
    %v517 = vld [vmem:[#allocation2] sm:$0xff]
    %v519 = vsel %vm133, %v517, 0
    %521 = vmatpush.msra.mxu0 0.0
    %522 = vmatpush.msra.mxu0 0.0
    %523 = vmatpush.msra.mxu0 0.0
    %524 = vmatpush.msra.mxu0 0.0
    %525 = vmatpush.msra.mxu0 0.0
    %526 = vmatpush.msra.mxu0 0.0
    %527 = vmatpush.msra.mxu0 0.0
    %528 = vmatpush.msra.mxu0 0.0
    %529 = vmatpush.msra.mxu0 0.0
    %530 = vmatpush.msra.mxu0 0.0
    %531 = vmatpush.msra.mxu0 %v104
    %532 = vmatpush.msra.mxu0 %v103
    %533 = vmatpush.msra.mxu0 %v102
    %534 = vmatpush.msra.mxu0 %v101
    %535 = vmatpush.msra.mxu0 %v100
    %536 = vmatpush.msra.mxu0 %v99
    %537 = vmatmul.f32.gmra.mxu0 %v519
    %v538 = vpop.f32.mrf.mxu0
    %v539 = vadd.f32 %v123, %v538
    %540 = vdwg.mxu0
    %541 = vmatpush.msra.mxu0 %v120
    %542 = vmatpush.msra.mxu0 %v119
    %543 = vmatpush.msra.mxu0 %v118
    %544 = vmatpush.msra.mxu0 %v117
    %545 = vmatpush.msra.mxu0 %v116
    %546 = vmatpush.msra.mxu0 %v115
    %547 = vmatpush.msra.mxu0 %v114
    %548 = vmatpush.msra.mxu0 %v113
    %549 = vmatpush.msra.mxu0 %v112
    %550 = vmatpush.msra.mxu0 %v111
    %551 = vmatpush.msra.mxu0 %v110
    %552 = vmatpush.msra.mxu0 %v109
    %553 = vmatpush.msra.mxu0 %v108
    %554 = vmatpush.msra.mxu0 %v107
    %555 = vmatpush.msra.mxu0 %v106
    %556 = vmatpush.msra.mxu0 %v105
    %557 = vmatmul.f32.gmra.mxu0 %v539
    %v558 = vpop.f32.mrf.mxu0
    %v559 = vadd.f32 %v127, %v558
    %560 = vdwg.mxu0
    %561 = vmax.xlane.f32.xlu0 %v559
    %v562 = vpop.xlane.xlu0 %561
    %v563 = vsub.f32 %v559, %v562
    %v564 = vmul.f32 %v563, 1.442695
    %v565 = vpow.pop %v564
    %566 = vadd.xlane.f32.xlu0 %v565
    %v567 = vpop.xlane.xlu0 %566
    %v568 = vlog2.pop %v567
    %v569 = vmul.f32 %v568, 0.6931472
    %v570 = vsub.f32 %v563, %v569
    %s571 = scalar_lea.vmem [#allocation11], 48
    %572 = vst [vmem:[%s571] sm:$0xff] %v570
    %574 = vrot.lane.b32.xlu0 %v539, 16
    %v575 = vpop.permute.xlu0 %574
    %577 = vst.msk [vmem:[#allocation2] sm:$0xff] %vm192, %v575
    %s578 = scalar_lea.vmem [#allocation6], 56
    %v579 = vld [vmem:[%s578] sm:$0xff]
    %580 = vst.msk [vmem:[#allocation2] sm:$0xff] %vm130, %v579
    %v581 = vld [vmem:[#allocation2] sm:$0xff]
    %v583 = vsel %vm133, %v581, 0
    %585 = vmatpush.msra.mxu0 0.0
    %586 = vmatpush.msra.mxu0 0.0
    %587 = vmatpush.msra.mxu0 0.0
    %588 = vmatpush.msra.mxu0 0.0
    %589 = vmatpush.msra.mxu0 0.0
    %590 = vmatpush.msra.mxu0 0.0
    %591 = vmatpush.msra.mxu0 0.0
    %592 = vmatpush.msra.mxu0 0.0
    %593 = vmatpush.msra.mxu0 0.0
    %594 = vmatpush.msra.mxu0 0.0
    %595 = vmatpush.msra.mxu0 %v104
    %596 = vmatpush.msra.mxu0 %v103
    %597 = vmatpush.msra.mxu0 %v102
    %598 = vmatpush.msra.mxu0 %v101
    %599 = vmatpush.msra.mxu0 %v100
    %600 = vmatpush.msra.mxu0 %v99
    %601 = vmatmul.f32.gmra.mxu0 %v583
    %v602 = vpop.f32.mrf.mxu0
    %v603 = vadd.f32 %v123, %v602
    %604 = vdwg.mxu0
    %605 = vmatpush.msra.mxu0 %v120
    %606 = vmatpush.msra.mxu0 %v119
    %607 = vmatpush.msra.mxu0 %v118
    %608 = vmatpush.msra.mxu0 %v117
    %609 = vmatpush.msra.mxu0 %v116
    %610 = vmatpush.msra.mxu0 %v115
    %611 = vmatpush.msra.mxu0 %v114
    %612 = vmatpush.msra.mxu0 %v113
    %613 = vmatpush.msra.mxu0 %v112
    %614 = vmatpush.msra.mxu0 %v111
    %615 = vmatpush.msra.mxu0 %v110
    %616 = vmatpush.msra.mxu0 %v109
    %617 = vmatpush.msra.mxu0 %v108
    %618 = vmatpush.msra.mxu0 %v107
    %619 = vmatpush.msra.mxu0 %v106
    %620 = vmatpush.msra.mxu0 %v105
    %621 = vmatmul.f32.gmra.mxu0 %v603
    %v622 = vpop.f32.mrf.mxu0
    %v623 = vadd.f32 %v127, %v622
    %624 = vdwg.mxu0
    %625 = vmax.xlane.f32.xlu0 %v623
    %v626 = vpop.xlane.xlu0 %625
    %v627 = vsub.f32 %v623, %v626
    %v628 = vmul.f32 %v627, 1.442695
    %v629 = vpow.pop %v628
    %630 = vadd.xlane.f32.xlu0 %v629
    %v631 = vpop.xlane.xlu0 %630
    %v632 = vlog2.pop %v631
    %v633 = vmul.f32 %v632, 0.6931472
    %v634 = vsub.f32 %v627, %v633
    %s635 = scalar_lea.vmem [#allocation11], 56
    %636 = vst [vmem:[%s635] sm:$0xff] %v634
    %638 = vrot.lane.b32.xlu0 %v603, 16
    %v639 = vpop.permute.xlu0 %638
    %641 = vst.msk [vmem:[#allocation2] sm:$0xff] %vm192, %v639
    %v642 = vld [vmem:[#allocation2] sm:$0xff]
    %644 = vrot.lane.b32.xlu0 %v642, 112
    %v645 = vpop.permute.xlu0 %644
    %vm647 = vcmask 261120
    %648 = vst.msk [vmem:[#allocation12] sm:$0xff] %vm647, %v645
    // Predicated region
    $region46: #{tpu_custom_call.1} parent=1 // pred_check
      _
    $region47: #{tpu_custom_call.1} parent=1 // pred_check_branch
      %650 = sbr.rel (0) target = $region49
    $region48: #{tpu_custom_call.1} parent=1 // pred_region
      %652 = vsyncadd [#allocation5], 0
      %s653 = sshll.u32 [#allocation11], 4
      %s654 = int_to_ptr.vmem [resolvable:$true] %s653
      %s655 = sshll.u32 %s6, 4
      %s656 = int_to_ptr.hbm [resolvable:$true] %s655
      %661 = dma.vmem_to_hbm [thread:$0]  %s654, 1024, %s656, [#allocation5], 128, 128, 8
    $region49: #{tpu_custom_call.1} parent=1 // pred_fallthru
      _
    // Predicated region
    $region50: #{tpu_custom_call.1} parent=1 // pred_check
      _
    $region51: #{tpu_custom_call.1} parent=1 // pred_check_branch
      %663 = sbr.rel (0) target = $region53
    $region52: #{tpu_custom_call.1} parent=1 // pred_region
      %665 = vsyncadd [#allocation13], 0
      %s667 = sshll.u32 [#allocation12], 4
      %s668 = int_to_ptr.vmem [resolvable:$true] %s667
      %s669 = sshll.u32 %s7, 4
      %s670 = int_to_ptr.hbm [resolvable:$true] %s669
      %672 = dma.vmem_to_hbm [thread:$0]  %s668, 128, %s670, [#allocation13]
    $region53: #{tpu_custom_call.1} parent=1 // pred_fallthru
      _
    // Predicated region
    $region54: #{tpu_custom_call.1} parent=1 // pred_check
      _
    $region55: #{tpu_custom_call.1} parent=1 // pred_check_branch
      %674 = sbr.rel (0) target = $region57
    $region56: #{tpu_custom_call.1} parent=1 // pred_region
      %676 = dma.done [#allocation5], 1024
    $region57: #{tpu_custom_call.1} parent=1 // pred_fallthru
      _
    // Predicated region
    $region58: #{tpu_custom_call.1} parent=1 // pred_check
      _
    $region59: #{tpu_custom_call.1} parent=1 // pred_check_branch
      %678 = sbr.rel (0) target = $region61
    $region60: #{tpu_custom_call.1} parent=1 // pred_region
      %680 = dma.done [#allocation13], 128
    $region61: #{tpu_custom_call.1} parent=1 // pred_fallthru
      _
    %681 = vsyncpa [#allocation4], 1
    %682 = vsyncpa [#allocation7], 1
    %683 = vsyncpa [#allocation10], 1
    %684 = vsyncpa [#allocation5], 1
    %685 = vsyncpa [#allocation13], 1

</llo_original>
